<compile_context>
chip_gen: v6e
topology: v6e:2x2x1
jax: 0.10.0
libtpu: 0.0.40
codegen_flags: <defaults>
</compile_context>

<pallas_src>
import jax
import jax.numpy as jnp
from jax.experimental import pallas as pl
from jax.experimental.pallas import tpu as pltpu


def _mlp_kernel(x_ref, w1_ref, b1_ref, w2_ref, b2_ref, o_ref):
    # x_ref : (tb, K)  natural-layout input slab (double-buffered by Pallas)
    # w1_ref: (K, H)   linear1 weight (VMEM-resident, == torch weight.T)
    # b1_ref: (1, H)   linear1 bias   (VMEM-resident, f32)
    # w2_ref: (H, 1)   linear2 weight (VMEM-resident, f32)
    # b2_ref: (1, 1)   linear2 bias, SMEM scalar
    # o_ref : (tb, 1)  output column (tiny vs. the x slab)
    x = x_ref[...]

    # Linear1 on the MXU with f32 accumulation: (tb, K) @ (K, H) -> (tb, H).
    h = jnp.dot(x, w1_ref[...], preferred_element_type=jnp.float32)

    # Bias + ReLU on the VPU, kept in f32 on all chip generations.
    h = jnp.maximum(h + b1_ref[...], 0.0)

    # Linear2 (single output feature) also on the MXU: (tb, H) @ (H, 1) -> (tb, 1).
    # MXU is nearly idle here; this avoids an extra (tb, H) VPU pass + reduce.
    z = jnp.dot(h, w2_ref[...], preferred_element_type=jnp.float32)
    z = z + b2_ref[0, 0]

    # Sigmoid: exp on the EUP; exact divide on a (tb, 1) column is negligible.
    o_ref[...] = (1.0 / (1.0 + jnp.exp(-z))).astype(o_ref.dtype)


def _cdiv(a, b):
    return -(-a // b)


def _round_up(x, m):
    return _cdiv(x, m) * m


def _vmem_capacity_bytes():
    try:
        return int(pltpu.get_tpu_info().vmem_capacity_bytes)
    except Exception:
        return 64 * 1024 * 1024  # conservative (v7x)


def _pick_batch_tile(B, K, H, itemsize):
    """Largest batch tile whose total live VMEM fits the per-chip budget.

    Accounts for: 2x double-buffered x tile, 2x w1 (constant index_map still
    gets two buffers), the (tb, H) f32 activation + fused temporaries, biases,
    and the double-buffered output column.
    """
    cap = _vmem_capacity_bytes()
    budget = min(int(cap * 0.65), 96 * 1024 * 1024)      # ~42 MiB v7x, ~83 MiB v5e/v6e

    fixed = 2 * K * H * itemsize + 2 * (H * 4 + H * 4) + (1 << 16)
    per_row = 2 * K * itemsize + 2 * H * 4 + 2 * 4

    tb = max(8, (budget - fixed) // per_row)
    tb = min(tb, 1024)                                    # streaming plateaus at 512-1024
    if tb >= 128:
        tb = (tb // 128) * 128
    else:
        tb = max(8, (tb // 8) * 8)

    # Ensure >= 2 (typically ~4) grid steps for large batches so the "parallel"
    # batch axis can actually shard across both TensorCores on v7x.
    if B >= 256:
        tb = min(tb, max(128, _round_up(_cdiv(B, 4), 128)))

    # Don't over-tile tiny batches.
    tb = min(tb, _round_up(B, 8))
    return max(tb, 8)


def neural_net1_forward(x, w1, b1, w2, b2):
    """Forward of Linear(input,hidden) -> ReLU -> Linear(hidden,1) -> Sigmoid.

    x : (B, input_size)
    w1: (input_size, hidden)   == linear1.weight.T
    b1: (hidden,)
    w2: (hidden, 1)            == linear2.weight.T
    b2: (1,)
    """
    B, K = x.shape
    H = w1.shape[1]
    out_dtype = x.dtype
    itemsize = jnp.dtype(x.dtype).itemsize

    tb = _pick_batch_tile(B, K, H, itemsize)
    grid_b = _cdiv(B, tb)
    b_pad = grid_b * tb

    # No padding copy in the common aligned case; only a ragged tail pads.
    x_in = x if b_pad == B else jnp.pad(x, ((0, b_pad - B), (0, 0)))

    b1c = b1.reshape(1, H).astype(jnp.float32)   # (1, H) broadcast over sublanes
    w2c = w2.reshape(H, 1).astype(jnp.float32)
    b2s = b2.reshape(1, 1).astype(jnp.float32)   # -> SMEM scalar

    # VMEM limit derived from what is actually live (plus headroom), capped to
    # the chip's capacity (v7x 64 MiB vs v5e/v6e 128 MiB).
    need = (2 * tb * K * itemsize          # x double-buffer
            + 2 * K * H * itemsize         # w1 (conservatively 2 buffers)
            + 2 * tb * H * 4               # (tb, H) f32 activation + temporaries
            + 2 * (H * 4 + H * 4)          # b1, w2
            + 2 * tb * 4)                  # output double-buffer
    cap = _vmem_capacity_bytes()
    vmem_limit = int(min(min(int(cap * 0.80), 104 * 1024 * 1024),
                         max(need + (4 << 20), 16 << 20)))

    out = pl.pallas_call(
        _mlp_kernel,
        grid=(grid_b,),
        out_shape=jax.ShapeDtypeStruct((b_pad, 1), jnp.float32),
        in_specs=[
            pl.BlockSpec((tb, K), lambda i: (i, 0)),            # x slab (pipelined)
            pl.BlockSpec((K, H), lambda i: (0, 0)),             # w1 VMEM-resident
            pl.BlockSpec((1, H), lambda i: (0, 0)),             # b1 VMEM-resident
            pl.BlockSpec((H, 1), lambda i: (0, 0)),             # w2 VMEM-resident
            pl.BlockSpec(memory_space=pltpu.MemorySpace.SMEM),  # b2 scalar in SMEM
        ],
        out_specs=pl.BlockSpec((tb, 1), lambda i: (i, 0)),
        compiler_params=pltpu.CompilerParams(
            dimension_semantics=("parallel",),   # batch axis -> both TCs on v7x
            vmem_limit_bytes=vmem_limit,
        ),
    )(x_in, w1, b1c, w2c, b2s)

    return out[:B].astype(out_dtype)


if __name__ == "__main__":
    batch = 8
    input_size = 16
    hidden_size = 32

    key = jax.random.PRNGKey(0)
    kx, kw1, kb1, kw2, kb2 = jax.random.split(key, 5)

    x = jax.random.normal(kx, (batch, input_size), dtype=jnp.float32)
    bound1 = 1.0 / input_size ** 0.5
    bound2 = 1.0 / hidden_size ** 0.5
    w1 = jax.random.uniform(kw1, (input_size, hidden_size), jnp.float32,
                            minval=-bound1, maxval=bound1)
    b1 = jax.random.uniform(kb1, (hidden_size,), jnp.float32,
                            minval=-bound1, maxval=bound1)
    w2 = jax.random.uniform(kw2, (hidden_size, 1), jnp.float32,
                            minval=-bound2, maxval=bound2)
    b2 = jax.random.uniform(kb2, (1,), jnp.float32,
                            minval=-bound2, maxval=bound2)

    # Pure-JAX reference.
    ref = 1.0 / (1.0 + jnp.exp(-(jnp.maximum(x @ w1 + b1, 0.0) @ w2 + b2)))

    out = neural_net1_forward(x, w1, b1, w2, b2)
    jax.block_until_ready(out)
    assert out.shape == (batch, 1)
    err = float(jnp.max(jnp.abs(out - ref)))
    assert err < 1e-5, f"max err {err}"

    print("KERNEL_OK")
</pallas_src>

<mosaic_0001>
module attributes {stable_mosaic.version = 11 : i64} {
  func.func @_mlp_kernel(%arg0: i32, %arg1: memref<8x16xf32, #tpu.memory_space<vmem>>, %arg2: memref<16x32xf32, #tpu.memory_space<vmem>>, %arg3: memref<1x32xf32, #tpu.memory_space<vmem>>, %arg4: memref<32x1xf32, #tpu.memory_space<vmem>>, %arg5: memref<1x1xf32, #tpu.memory_space<smem>>, %arg6: memref<8x1xf32, #tpu.memory_space<vmem>>) attributes {dimension_semantics = [#tpu.dimension_semantics<parallel>], iteration_bounds = array<i64: 1>, scalar_prefetch = 0 : i64, scratch_operands = 0 : i64, tpu.core_type = #tpu.core_type<tc>, window_params = [{transform_indices = @transform_0, window_bounds = array<i64: 8, 16>}, {pipeline_mode = #tpu.pipeline_mode<synchronous>, transform_indices = @transform_1, window_bounds = array<i64: 16, 32>}, {pipeline_mode = #tpu.pipeline_mode<synchronous>, transform_indices = @transform_2, window_bounds = array<i64: 1, 32>}, {pipeline_mode = #tpu.pipeline_mode<synchronous>, transform_indices = @transform_3, window_bounds = array<i64: 32, 1>}, {transform_indices = @transform_4, window_bounds = array<i64: 1, 1>}, {transform_indices = @transform_5, window_bounds = array<i64: 8, 1>}]} {
    %c0 = arith.constant 0 : index
    %c0_0 = arith.constant 0 : index
    %0 = vector.load %arg1[%c0, %c0_0] : memref<8x16xf32, #tpu.memory_space<vmem>>, vector<8x16xf32>
    %c0_1 = arith.constant 0 : index
    %c0_2 = arith.constant 0 : index
    %1 = vector.load %arg2[%c0_1, %c0_2] : memref<16x32xf32, #tpu.memory_space<vmem>>, vector<16x32xf32>
    %cst = arith.constant dense<0.000000e+00> : vector<8x32xf32>
    %2 = tpu.matmul %0, %1, %cst {dimension_numbers = #tpu.dot_dimension_numbers<[1], [0], [0], [1], [0, 0, 1, 1], [], []>} : vector<8x16xf32>, vector<16x32xf32>, vector<8x32xf32> -> vector<8x32xf32>
    %c0_3 = arith.constant 0 : index
    %c0_4 = arith.constant 0 : index
    %3 = vector.load %arg3[%c0_3, %c0_4] : memref<1x32xf32, #tpu.memory_space<vmem>>, vector<1x32xf32>
    %4 = vector.broadcast %3 : vector<1x32xf32> to vector<8x32xf32>
    %5 = arith.addf %2, %4 : vector<8x32xf32>
    %cst_5 = arith.constant 0.000000e+00 : f32
    %6 = vector.broadcast %cst_5 : f32 to vector<8x32xf32>
    %7 = arith.maximumf %5, %6 : vector<8x32xf32>
    %c0_6 = arith.constant 0 : index
    %c0_7 = arith.constant 0 : index
    %8 = vector.load %arg4[%c0_6, %c0_7] : memref<32x1xf32, #tpu.memory_space<vmem>>, vector<32x1xf32>
    %cst_8 = arith.constant dense<0.000000e+00> : vector<8x1xf32>
    %9 = tpu.matmul %7, %8, %cst_8 {dimension_numbers = #tpu.dot_dimension_numbers<[1], [0], [0], [1], [0, 0, 1, 1], [], []>} : vector<8x32xf32>, vector<32x1xf32>, vector<8x1xf32> -> vector<8x1xf32>
    %c0_9 = arith.constant 0 : index
    %c0_10 = arith.constant 0 : index
    %10 = memref.load %arg5[%c0_9, %c0_10] : memref<1x1xf32, #tpu.memory_space<smem>>
    %11 = vector.broadcast %10 : f32 to vector<8x1xf32>
    %12 = arith.addf %9, %11 : vector<8x1xf32>
    %cst_11 = arith.constant 0.000000e+00 : f32
    %13 = vector.broadcast %cst_11 : f32 to vector<8x1xf32>
    %14 = arith.subf %13, %12 : vector<8x1xf32>
    %15 = math.exp %14 : vector<8x1xf32>
    %cst_12 = arith.constant 1.000000e+00 : f32
    %16 = vector.broadcast %cst_12 : f32 to vector<8x1xf32>
    %17 = arith.addf %16, %15 : vector<8x1xf32>
    %cst_13 = arith.constant 1.000000e+00 : f32
    %18 = vector.broadcast %cst_13 : f32 to vector<8x1xf32>
    %19 = arith.divf %18, %17 : vector<8x1xf32>
    %c0_14 = arith.constant 0 : index
    %c0_15 = arith.constant 0 : index
    %20 = vector.load %arg6[%c0_14, %c0_15] : memref<8x1xf32, #tpu.memory_space<vmem>>, vector<8x1xf32>
    tpu.vector_store %arg6[%c0_14, %c0_15], %19 {strides = array<i32>} : memref<8x1xf32, #tpu.memory_space<vmem>>, vector<8x1xf32>,
    return
  }
  func.func @transform_0(%arg0: i32) -> (i32, i32) {
    %c0_i32 = arith.constant 0 : i32
    %c0_i32_0 = arith.constant 0 : i32
    return %arg0, %c0_i32 : i32, i32
  }
  func.func @transform_1(%arg0: i32) -> (i32, i32) {
    %c0_i32 = arith.constant 0 : i32
    %c0_i32_0 = arith.constant 0 : i32
    %c0_i32_1 = arith.constant 0 : i32
    return %c0_i32, %c0_i32_0 : i32, i32
  }
  func.func @transform_2(%arg0: i32) -> (i32, i32) {
    %c0_i32 = arith.constant 0 : i32
    %c0_i32_0 = arith.constant 0 : i32
    %c0_i32_1 = arith.constant 0 : i32
    return %c0_i32, %c0_i32_0 : i32, i32
  }
  func.func @transform_3(%arg0: i32) -> (i32, i32) {
    %c0_i32 = arith.constant 0 : i32
    %c0_i32_0 = arith.constant 0 : i32
    %c0_i32_1 = arith.constant 0 : i32
    return %c0_i32, %c0_i32_0 : i32, i32
  }
  func.func @transform_4(%arg0: i32) -> (i32, i32) {
    %c0_i32 = arith.constant 0 : i32
    %c0_i32_0 = arith.constant 0 : i32
    %c0_i32_1 = arith.constant 0 : i32
    return %c0_i32, %c0_i32_0 : i32, i32
  }
  func.func @transform_5(%arg0: i32) -> (i32, i32) {
    %c0_i32 = arith.constant 0 : i32
    %c0_i32_0 = arith.constant 0 : i32
    return %arg0, %c0_i32 : i32, i32
  }
}

</mosaic_0001>

<llo_original>
// kernel: tpu_custom_call.1
$region0: #{tpu_custom_call.1}
  #allocation0 [shape = 'u32[]', space=smem, size = 0x4, offset = 0x4, fixed_abs, tag = 'smem constant byte address 0x4 - core index']
  #allocation1 [shape = 'u32[144,128]{1,0:T(1,128)}', space=vmem, size = 0x12000, scoped, tag = 'internal scratch']
  #allocation2 [shape = 'f32[1,1]{1,0:T(1,128)S(6)}', space=smem, size = 0x200, scoped, tag = 'scoped memory for tpu_custom_call.1']
  %s0 = inlined_call_operand.vmem [shape: f32[8,16], index: 0, kind: input, shape index: {}]
  %s1 = inlined_call_operand.vmem [shape: f32[16,32], index: 1, kind: input, shape index: {}]
  %s2 = inlined_call_operand.vmem [shape: f32[1,32], index: 2, kind: input, shape index: {}]
  %s3 = inlined_call_operand.vmem [shape: f32[32,1], index: 3, kind: input, shape index: {}]
  %s4 = inlined_call_operand.<no memory space> [shape: f32[1,1], index: 4, kind: input, shape index: {}]
  %s5 = inlined_call_operand.vmem [shape: f32[8,1], index: 5, kind: output, shape index: {}]
  %s6 = sld [smem:[#allocation0]]
  $region30: #{tpu_custom_call.1} parent=0
    _
  %s8 = ssub.s32 1, %s6
  %s9 = scalar_select 0, %s8, %s6
  %10 = sst [smem:[#allocation2]] %s4
  // Predicated region
  $region2: #{tpu_custom_call.1} parent=0 // pred_check
    _
  $region3: #{tpu_custom_call.1} parent=0 // pred_check_branch
    %12 = sbr.rel (0) target = $region5
  $region4: #{tpu_custom_call.1} parent=0 // pred_region
    _
  $region5: #{tpu_custom_call.1} parent=0 // pred_fallthru
    _
  // Predicated region
  $region6: #{tpu_custom_call.1} parent=0 // pred_check
    _
  $region7: #{tpu_custom_call.1} parent=0 // pred_check_branch
    %14 = sbr.rel (0) target = $region9
  $region8: #{tpu_custom_call.1} parent=0 // pred_region
    _
  $region9: #{tpu_custom_call.1} parent=0 // pred_fallthru
    _
  // Predicated region
  $region10: #{tpu_custom_call.1} parent=0 // pred_check
    _
  $region11: #{tpu_custom_call.1} parent=0 // pred_check_branch
    %16 = sbr.rel (0) target = $region13
  $region12: #{tpu_custom_call.1} parent=0 // pred_region
    _
  $region13: #{tpu_custom_call.1} parent=0 // pred_fallthru
    _
  // Predicated region
  $region14: #{tpu_custom_call.1} parent=0 // pred_check
    _
  $region15: #{tpu_custom_call.1} parent=0 // pred_check_branch
    %18 = sbr.rel (0) target = $region17
  $region16: #{tpu_custom_call.1} parent=0 // pred_region
    _
  $region17: #{tpu_custom_call.1} parent=0 // pred_fallthru
    _
  // Predicated region
  $region18: #{tpu_custom_call.1} parent=0 // pred_check
    _
  $region19: #{tpu_custom_call.1} parent=0 // pred_check_branch
    %20 = sbr.rel (0) target = $region21
  $region20: #{tpu_custom_call.1} parent=0 // pred_region
    _
  $region21: #{tpu_custom_call.1} parent=0 // pred_fallthru
    _
  %v21 = vld [vmem:[%s0] sm:$0xff]
  %v22 = vld [vmem:[%s1] sm:$0xff]
  %v23 = vld [vmem:[%s1 + $0x8] sm:$0xff]
  %v24 = vld [vmem:[%s2] sm:$0x1]
  %v26 = vlaneseq
  %v27 = vshrl.u32 %v26, 7
  %v28 = vsub.s32 0, %v27
  %v29 = vrot.slane %v24, %v28
  %vm31 = vcmask 130048
  %v33 = vsel %vm31, %v21, 0
  %35 = vmatprep.subr.mxu0 0.0
  %36 = vmatpush1.msra.mxu0 0.0
  %37 = vmatprep.subr.mxu0 0.0
  %38 = vmatpush1.msra.mxu0 0.0
  %39 = vmatprep.subr.mxu0 0.0
  %40 = vmatpush1.msra.mxu0 0.0
  %41 = vmatprep.subr.mxu0 0.0
  %42 = vmatpush1.msra.mxu0 0.0
  %43 = vmatprep.subr.mxu0 0.0
  %44 = vmatpush1.msra.mxu0 0.0
  %45 = vmatprep.subr.mxu0 0.0
  %46 = vmatpush1.msra.mxu0 0.0
  %47 = vmatprep.subr.mxu0 0.0
  %48 = vmatpush1.msra.mxu0 0.0
  %49 = vmatprep.subr.mxu0 0.0
  %50 = vmatpush1.msra.mxu0 0.0
  %51 = vmatprep.subr.mxu0 0.0
  %52 = vmatpush1.msra.mxu0 0.0
  %53 = vmatprep.subr.mxu0 0.0
  %54 = vmatpush1.msra.mxu0 0.0
  %55 = vmatprep.subr.mxu0 0.0
  %56 = vmatpush1.msra.mxu0 0.0
  %57 = vmatprep.subr.mxu0 0.0
  %58 = vmatpush1.msra.mxu0 0.0
  %59 = vmatprep.subr.mxu0 0.0
  %60 = vmatpush1.msra.mxu0 0.0
  %61 = vmatprep.subr.mxu0 0.0
  %62 = vmatpush1.msra.mxu0 0.0
  %63 = vmatprep.subr.mxu0 0.0
  %64 = vmatpush1.msra.mxu0 %v23
  %65 = vmatprep.subr.mxu0 0.0
  %66 = vmatpush1.msra.mxu0 %v22
  %67 = vmatprep.subr.mxu0 0.0
  %68 = vmatpush2.msra.mxu0 0.0
  %69 = vmatprep.subr.mxu0 0.0
  %70 = vmatpush2.msra.mxu0 0.0
  %71 = vmatprep.subr.mxu0 0.0
  %72 = vmatpush2.msra.mxu0 0.0
  %73 = vmatprep.subr.mxu0 0.0
  %74 = vmatpush2.msra.mxu0 0.0
  %75 = vmatprep.subr.mxu0 0.0
  %76 = vmatpush2.msra.mxu0 0.0
  %77 = vmatprep.subr.mxu0 0.0
  %78 = vmatpush2.msra.mxu0 0.0
  %79 = vmatprep.subr.mxu0 0.0
  %80 = vmatpush2.msra.mxu0 0.0
  %81 = vmatprep.subr.mxu0 0.0
  %82 = vmatpush2.msra.mxu0 0.0
  %83 = vmatprep.subr.mxu0 0.0
  %84 = vmatpush2.msra.mxu0 0.0
  %85 = vmatprep.subr.mxu0 0.0
  %86 = vmatpush2.msra.mxu0 0.0
  %87 = vmatprep.subr.mxu0 0.0
  %88 = vmatpush2.msra.mxu0 0.0
  %89 = vmatprep.subr.mxu0 0.0
  %90 = vmatpush2.msra.mxu0 0.0
  %91 = vmatprep.subr.mxu0 0.0
  %92 = vmatpush2.msra.mxu0 0.0
  %93 = vmatprep.subr.mxu0 0.0
  %94 = vmatpush2.msra.mxu0 0.0
  %95 = vmatprep.subr.mxu0 0.0
  %96 = vmatpush2.msra.mxu0 0.0
  %97 = vmatprep.subr.mxu0 0.0
  %98 = vmatpush2.msra.mxu0 0.0
  %99 = vmatprep.mubr.f32.mxu0 0.0
  %100 = vmatmul.mubr.f32.gmra.mxu0 %v33
  %v101 = vpop.f32.mrf.mxu0
  %v102 = vadd.f32 %v29, %v101
  %v103 = vpop.f32.mrf.mxu0
  %104 = vdwg.mxu0
  %v105 = vmax.f32 %v102, 0.0
  %v106 = vld [vmem:[%s3] sm:$0xff]
  %v107 = vld [vmem:[%s3 + $0x8] sm:$0xff]
  %v108 = vld [vmem:[%s3 + $0x10] sm:$0xff]
  %v109 = vld [vmem:[%s3 + $0x18] sm:$0xff]
  %s110 = sld [smem:[#allocation2]]
  %v111 = vstv %s110
  %vm112 = vcmask 261120
  %v114 = vsel %vm112, %v105, 0
  %116 = vmatprep.subr.mxu0 0.0
  %117 = vmatpush1.msra.mxu0 0.0
  %118 = vmatprep.subr.mxu0 0.0
  %119 = vmatpush1.msra.mxu0 0.0
  %120 = vmatprep.subr.mxu0 0.0
  %121 = vmatpush1.msra.mxu0 0.0
  %122 = vmatprep.subr.mxu0 0.0
  %123 = vmatpush1.msra.mxu0 0.0
  %124 = vmatprep.subr.mxu0 0.0
  %125 = vmatpush1.msra.mxu0 0.0
  %126 = vmatprep.subr.mxu0 0.0
  %127 = vmatpush1.msra.mxu0 0.0
  %128 = vmatprep.subr.mxu0 0.0
  %129 = vmatpush1.msra.mxu0 0.0
  %130 = vmatprep.subr.mxu0 0.0
  %131 = vmatpush1.msra.mxu0 0.0
  %132 = vmatprep.subr.mxu0 0.0
  %133 = vmatpush1.msra.mxu0 0.0
  %134 = vmatprep.subr.mxu0 0.0
  %135 = vmatpush1.msra.mxu0 0.0
  %136 = vmatprep.subr.mxu0 0.0
  %137 = vmatpush1.msra.mxu0 0.0
  %138 = vmatprep.subr.mxu0 0.0
  %139 = vmatpush1.msra.mxu0 0.0
  %140 = vmatprep.subr.mxu0 0.0
  %141 = vmatpush1.msra.mxu0 %v109
  %142 = vmatprep.subr.mxu0 0.0
  %143 = vmatpush1.msra.mxu0 %v108
  %144 = vmatprep.subr.mxu0 0.0
  %145 = vmatpush1.msra.mxu0 %v107
  %146 = vmatprep.subr.mxu0 0.0
  %147 = vmatpush1.msra.mxu0 %v106
  %148 = vmatprep.subr.mxu0 0.0
  %149 = vmatpush2.msra.mxu0 0.0
  %150 = vmatprep.subr.mxu0 0.0
  %151 = vmatpush2.msra.mxu0 0.0
  %152 = vmatprep.subr.mxu0 0.0
  %153 = vmatpush2.msra.mxu0 0.0
  %154 = vmatprep.subr.mxu0 0.0
  %155 = vmatpush2.msra.mxu0 0.0
  %156 = vmatprep.subr.mxu0 0.0
  %157 = vmatpush2.msra.mxu0 0.0
  %158 = vmatprep.subr.mxu0 0.0
  %159 = vmatpush2.msra.mxu0 0.0
  %160 = vmatprep.subr.mxu0 0.0
  %161 = vmatpush2.msra.mxu0 0.0
  %162 = vmatprep.subr.mxu0 0.0
  %163 = vmatpush2.msra.mxu0 0.0
  %164 = vmatprep.subr.mxu0 0.0
  %165 = vmatpush2.msra.mxu0 0.0
  %166 = vmatprep.subr.mxu0 0.0
  %167 = vmatpush2.msra.mxu0 0.0
  %168 = vmatprep.subr.mxu0 0.0
  %169 = vmatpush2.msra.mxu0 0.0
  %170 = vmatprep.subr.mxu0 0.0
  %171 = vmatpush2.msra.mxu0 0.0
  %172 = vmatprep.subr.mxu0 0.0
  %173 = vmatpush2.msra.mxu0 0.0
  %174 = vmatprep.subr.mxu0 0.0
  %175 = vmatpush2.msra.mxu0 0.0
  %176 = vmatprep.subr.mxu0 0.0
  %177 = vmatpush2.msra.mxu0 0.0
  %178 = vmatprep.subr.mxu0 0.0
  %179 = vmatpush2.msra.mxu0 0.0
  %180 = vmatprep.mubr.f32.mxu0 0.0
  %181 = vmatmul.mubr.f32.gmra.mxu0 %v114
  %v182 = vpop.f32.mrf.mxu0
  %v183 = vadd.f32 %v111, %v182
  %v184 = vpop.f32.mrf.mxu0
  %185 = vdwg.mxu0
  %v186 = vsub.f32 0.0, %v183
  %v187 = vmul.f32 %v186, 1.442695
  %v188 = vpow.pop %v187
  %v189 = vadd.f32 %v188, 1.0
  %v190 = vrcp.pop %v189
  %v191 = vmul.f32 1.0, %v190
  %vm192 = vcmask 7168
  %193 = vst.msk [vmem:[%s5] sm:$0xff] %vm192, %v191
  // Predicated region
  $region22: #{tpu_custom_call.1} parent=0 // pred_check
    _
  $region23: #{tpu_custom_call.1} parent=0 // pred_check_branch
    %195 = sbr.rel (0) target = $region25
  $region24: #{tpu_custom_call.1} parent=0 // pred_region
    _
  $region25: #{tpu_custom_call.1} parent=0 // pred_fallthru
    _
  // Predicated region
  $region26: #{tpu_custom_call.1} parent=0 // pred_check
    _
  $region27: #{tpu_custom_call.1} parent=0 // pred_check_branch
    %197 = sbr.rel (0) target = $region29
  $region28: #{tpu_custom_call.1} parent=0 // pred_region
    _
  $region29: #{tpu_custom_call.1} parent=0 // pred_fallthru
    _

</llo_original>
